<compile_context>
chip_gen: v5e
topology: v5e:2x2
jax: 0.10.0
libtpu: 0.0.40
codegen_flags: <defaults>
</compile_context>

<pallas_src>
import math

import jax
import jax.numpy as jnp
import numpy as np
from jax.experimental import pallas as pl
from jax.experimental.pallas import tpu as pltpu


def _compute_indices(t: int, num_samples: int) -> np.ndarray:
    # Same as torchvision: linspace(0, T-1, num_samples) then truncating cast.
    idx = np.linspace(0, t - 1, num_samples).astype(np.int64)
    return np.clip(idx, 0, t - 1).astype(np.int32)


def _coalesce_runs(indices: np.ndarray):
    """Group maximal runs of consecutive source indices.

    Returns a list of (src_start, dst_start, length) tuples such that
    out[dst_start : dst_start+length] = x[src_start : src_start+length].
    """
    runs = []
    n = len(indices)
    i = 0
    while i < n:
        src0 = int(indices[i])
        length = 1
        while i + length < n and int(indices[i + length]) == src0 + length:
            length += 1
        runs.append((src0, i, length))
        i += length
    return runs


def _make_gather_kernel(runs, depth):
    """Build a kernel that copies each run HBM->HBM with `depth` DMAs in flight."""

    def kernel(x_hbm, o_hbm, sems):
        copies = []
        for r, (src, dst, length) in enumerate(runs):
            # Before reusing a semaphore slot, drain the copy that used it.
            if r >= depth:
                copies[r - depth].wait()
            cp = pltpu.make_async_copy(
                x_hbm.at[pl.ds(src, length)],
                o_hbm.at[pl.ds(dst, length)],
                sems.at[r % depth],
            )
            cp.start()
            copies.append(cp)
        # Drain the tail (at most `depth` copies still in flight).
        for cp in copies[max(0, len(copies) - depth):]:
            cp.wait()

    return kernel


def uniform_temporal_subsample(x: jax.Array, num_samples: int) -> jax.Array:
    """Gather `num_samples` frames uniformly along the leading temporal axis."""
    T = x.shape[0]
    frame_shape = x.shape[1:]
    d = int(np.prod(frame_shape))

    indices = _compute_indices(T, num_samples)
    runs = _coalesce_runs(indices)
    depth = max(1, min(4, len(runs)))  # 2-4 DMAs in flight is plenty for HBM BW.

    # Lane-dense / fully contiguous layout: one row per frame.
    x_flat = x.reshape(T, d)

    out_flat = pl.pallas_call(
        _make_gather_kernel(runs, depth),
        out_shape=jax.ShapeDtypeStruct((num_samples, d), x.dtype),
        in_specs=[pl.BlockSpec(memory_space=pl.ANY)],   # raw HBM ref, no auto-DMA
        out_specs=pl.BlockSpec(memory_space=pl.ANY),    # raw HBM ref, written via DMA
        scratch_shapes=[pltpu.SemaphoreType.DMA((depth,))],
    )(x_flat)

    return out_flat.reshape((num_samples,) + frame_shape)


class UniformTemporalSubsample:
    """JAX/Pallas equivalent of the PyTorch module."""

    def __init__(self, target_fps: int, clip_duration: float):
        self.target_fps = target_fps
        self.clip_duration = clip_duration
        self.num_samples = math.ceil(target_fps * clip_duration)

    def __call__(self, x: jax.Array) -> jax.Array:
        return uniform_temporal_subsample(x, self.num_samples)


if __name__ == "__main__":
    # Small deterministic example: T=8 frames, C=4, H=16, W=16.
    key = jax.random.PRNGKey(0)
    T, C, H, W = 8, 4, 16, 16
    x = jax.random.normal(key, (T, C, H, W), dtype=jnp.float32)

    target_fps = 2
    clip_duration = 2.0  # -> num_samples = ceil(4.0) = 4
    module = UniformTemporalSubsample(target_fps, clip_duration)

    out = module(x)
    out = jax.block_until_ready(out)

    # Reference check against plain JAX index_select semantics.
    ref_idx = _compute_indices(T, module.num_samples)
    ref = x[jnp.asarray(ref_idx)]
    assert out.shape == (module.num_samples, C, H, W), out.shape
    assert out.dtype == x.dtype
    np.testing.assert_array_equal(np.asarray(out), np.asarray(ref))

    print("KERNEL_OK")
</pallas_src>

<mosaic_0001>
module attributes {stable_mosaic.version = 11 : i64} {
  func.func @kernel(%arg0: memref<8x1024xf32, #tpu.memory_space<any>>, %arg1: memref<4x1024xf32, #tpu.memory_space<any>>, %arg2: memref<4x!tpu.dma_semaphore, #tpu.memory_space<semaphore_mem>>) attributes {dimension_semantics = [], scalar_prefetch = 0 : i64, scratch_operands = 1 : i64, tpu.core_type = #tpu.core_type<tc>} {
    %c0_i32 = arith.constant 0 : i32
    %c0_i32_0 = arith.constant 0 : i32
    %c0_i32_1 = arith.constant 0 : i32
    %0 = tpu.memref_slice %arg0[%c0_i32_0, %c0_i32_1] : memref<8x1024xf32, #tpu.memory_space<any>> -> memref<1x1024xf32, #tpu.memory_space<any>>
    %c0_i32_2 = arith.constant 0 : i32
    %c0_i32_3 = arith.constant 0 : i32
    %1 = tpu.memref_slice %arg1[%c0_i32_2, %c0_i32_3] : memref<4x1024xf32, #tpu.memory_space<any>> -> memref<1x1024xf32, #tpu.memory_space<any>>
    %2 = tpu.memref_slice %arg2[%c0_i32] : memref<4x!tpu.dma_semaphore, #tpu.memory_space<semaphore_mem>> -> memref<1x!tpu.dma_semaphore, #tpu.memory_space<semaphore_mem>>
    %3 = tpu.memref_squeeze %2 : memref<1x!tpu.dma_semaphore, #tpu.memory_space<semaphore_mem>> -> memref<!tpu.dma_semaphore, #tpu.memory_space<semaphore_mem>>
    tpu.enqueue_dma source(%0 : memref<1x1024xf32, #tpu.memory_space<any>>) target(%1 : memref<1x1024xf32, #tpu.memory_space<any>>) target_semaphore(%3 : memref<!tpu.dma_semaphore, #tpu.memory_space<semaphore_mem>>)
    %c1_i32 = arith.constant 1 : i32
    %c2_i32 = arith.constant 2 : i32
    %c0_i32_4 = arith.constant 0 : i32
    %4 = tpu.memref_slice %arg0[%c2_i32, %c0_i32_4] : memref<8x1024xf32, #tpu.memory_space<any>> -> memref<1x1024xf32, #tpu.memory_space<any>>
    %c1_i32_5 = arith.constant 1 : i32
    %c0_i32_6 = arith.constant 0 : i32
    %5 = tpu.memref_slice %arg1[%c1_i32_5, %c0_i32_6] : memref<4x1024xf32, #tpu.memory_space<any>> -> memref<1x1024xf32, #tpu.memory_space<any>>
    %6 = tpu.memref_slice %arg2[%c1_i32] : memref<4x!tpu.dma_semaphore, #tpu.memory_space<semaphore_mem>> -> memref<1x!tpu.dma_semaphore, #tpu.memory_space<semaphore_mem>>
    %7 = tpu.memref_squeeze %6 : memref<1x!tpu.dma_semaphore, #tpu.memory_space<semaphore_mem>> -> memref<!tpu.dma_semaphore, #tpu.memory_space<semaphore_mem>>
    tpu.enqueue_dma source(%4 : memref<1x1024xf32, #tpu.memory_space<any>>) target(%5 : memref<1x1024xf32, #tpu.memory_space<any>>) target_semaphore(%7 : memref<!tpu.dma_semaphore, #tpu.memory_space<semaphore_mem>>)
    %c2_i32_7 = arith.constant 2 : i32
    %c4_i32 = arith.constant 4 : i32
    %c0_i32_8 = arith.constant 0 : i32
    %8 = tpu.memref_slice %arg0[%c4_i32, %c0_i32_8] : memref<8x1024xf32, #tpu.memory_space<any>> -> memref<1x1024xf32, #tpu.memory_space<any>>
    %c2_i32_9 = arith.constant 2 : i32
    %c0_i32_10 = arith.constant 0 : i32
    %9 = tpu.memref_slice %arg1[%c2_i32_9, %c0_i32_10] : memref<4x1024xf32, #tpu.memory_space<any>> -> memref<1x1024xf32, #tpu.memory_space<any>>
    %10 = tpu.memref_slice %arg2[%c2_i32_7] : memref<4x!tpu.dma_semaphore, #tpu.memory_space<semaphore_mem>> -> memref<1x!tpu.dma_semaphore, #tpu.memory_space<semaphore_mem>>
    %11 = tpu.memref_squeeze %10 : memref<1x!tpu.dma_semaphore, #tpu.memory_space<semaphore_mem>> -> memref<!tpu.dma_semaphore, #tpu.memory_space<semaphore_mem>>
    tpu.enqueue_dma source(%8 : memref<1x1024xf32, #tpu.memory_space<any>>) target(%9 : memref<1x1024xf32, #tpu.memory_space<any>>) target_semaphore(%11 : memref<!tpu.dma_semaphore, #tpu.memory_space<semaphore_mem>>)
    %c3_i32 = arith.constant 3 : i32
    %c7_i32 = arith.constant 7 : i32
    %c0_i32_11 = arith.constant 0 : i32
    %12 = tpu.memref_slice %arg0[%c7_i32, %c0_i32_11] : memref<8x1024xf32, #tpu.memory_space<any>> -> memref<1x1024xf32, #tpu.memory_space<any>>
    %c3_i32_12 = arith.constant 3 : i32
    %c0_i32_13 = arith.constant 0 : i32
    %13 = tpu.memref_slice %arg1[%c3_i32_12, %c0_i32_13] : memref<4x1024xf32, #tpu.memory_space<any>> -> memref<1x1024xf32, #tpu.memory_space<any>>
    %14 = tpu.memref_slice %arg2[%c3_i32] : memref<4x!tpu.dma_semaphore, #tpu.memory_space<semaphore_mem>> -> memref<1x!tpu.dma_semaphore, #tpu.memory_space<semaphore_mem>>
    %15 = tpu.memref_squeeze %14 : memref<1x!tpu.dma_semaphore, #tpu.memory_space<semaphore_mem>> -> memref<!tpu.dma_semaphore, #tpu.memory_space<semaphore_mem>>
    tpu.enqueue_dma source(%12 : memref<1x1024xf32, #tpu.memory_space<any>>) target(%13 : memref<1x1024xf32, #tpu.memory_space<any>>) target_semaphore(%15 : memref<!tpu.dma_semaphore, #tpu.memory_space<semaphore_mem>>)
    %c0_i32_14 = arith.constant 0 : i32
    %c0_i32_15 = arith.constant 0 : i32
    %c0_i32_16 = arith.constant 0 : i32
    %16 = tpu.memref_slice %arg0[%c0_i32_15, %c0_i32_16] : memref<8x1024xf32, #tpu.memory_space<any>> -> memref<1x1024xf32, #tpu.memory_space<any>>
    %c0_i32_17 = arith.constant 0 : i32
    %c0_i32_18 = arith.constant 0 : i32
    %17 = tpu.memref_slice %arg1[%c0_i32_17, %c0_i32_18] : memref<4x1024xf32, #tpu.memory_space<any>> -> memref<1x1024xf32, #tpu.memory_space<any>>
    %18 = tpu.memref_slice %arg2[%c0_i32_14] : memref<4x!tpu.dma_semaphore, #tpu.memory_space<semaphore_mem>> -> memref<1x!tpu.dma_semaphore, #tpu.memory_space<semaphore_mem>>
    %19 = tpu.memref_squeeze %18 : memref<1x!tpu.dma_semaphore, #tpu.memory_space<semaphore_mem>> -> memref<!tpu.dma_semaphore, #tpu.memory_space<semaphore_mem>>
    tpu.wait_dma2 semaphore(%19 : memref<!tpu.dma_semaphore, #tpu.memory_space<semaphore_mem>>) src(%16 : memref<1x1024xf32, #tpu.memory_space<any>>) dst(%17 : memref<1x1024xf32, #tpu.memory_space<any>>)
    %c1_i32_19 = arith.constant 1 : i32
    %c2_i32_20 = arith.constant 2 : i32
    %c0_i32_21 = arith.constant 0 : i32
    %20 = tpu.memref_slice %arg0[%c2_i32_20, %c0_i32_21] : memref<8x1024xf32, #tpu.memory_space<any>> -> memref<1x1024xf32, #tpu.memory_space<any>>
    %c1_i32_22 = arith.constant 1 : i32
    %c0_i32_23 = arith.constant 0 : i32
    %21 = tpu.memref_slice %arg1[%c1_i32_22, %c0_i32_23] : memref<4x1024xf32, #tpu.memory_space<any>> -> memref<1x1024xf32, #tpu.memory_space<any>>
    %22 = tpu.memref_slice %arg2[%c1_i32_19] : memref<4x!tpu.dma_semaphore, #tpu.memory_space<semaphore_mem>> -> memref<1x!tpu.dma_semaphore, #tpu.memory_space<semaphore_mem>>
    %23 = tpu.memref_squeeze %22 : memref<1x!tpu.dma_semaphore, #tpu.memory_space<semaphore_mem>> -> memref<!tpu.dma_semaphore, #tpu.memory_space<semaphore_mem>>
    tpu.wait_dma2 semaphore(%23 : memref<!tpu.dma_semaphore, #tpu.memory_space<semaphore_mem>>) src(%20 : memref<1x1024xf32, #tpu.memory_space<any>>) dst(%21 : memref<1x1024xf32, #tpu.memory_space<any>>)
    %c2_i32_24 = arith.constant 2 : i32
    %c4_i32_25 = arith.constant 4 : i32
    %c0_i32_26 = arith.constant 0 : i32
    %24 = tpu.memref_slice %arg0[%c4_i32_25, %c0_i32_26] : memref<8x1024xf32, #tpu.memory_space<any>> -> memref<1x1024xf32, #tpu.memory_space<any>>
    %c2_i32_27 = arith.constant 2 : i32
    %c0_i32_28 = arith.constant 0 : i32
    %25 = tpu.memref_slice %arg1[%c2_i32_27, %c0_i32_28] : memref<4x1024xf32, #tpu.memory_space<any>> -> memref<1x1024xf32, #tpu.memory_space<any>>
    %26 = tpu.memref_slice %arg2[%c2_i32_24] : memref<4x!tpu.dma_semaphore, #tpu.memory_space<semaphore_mem>> -> memref<1x!tpu.dma_semaphore, #tpu.memory_space<semaphore_mem>>
    %27 = tpu.memref_squeeze %26 : memref<1x!tpu.dma_semaphore, #tpu.memory_space<semaphore_mem>> -> memref<!tpu.dma_semaphore, #tpu.memory_space<semaphore_mem>>
    tpu.wait_dma2 semaphore(%27 : memref<!tpu.dma_semaphore, #tpu.memory_space<semaphore_mem>>) src(%24 : memref<1x1024xf32, #tpu.memory_space<any>>) dst(%25 : memref<1x1024xf32, #tpu.memory_space<any>>)
    %c3_i32_29 = arith.constant 3 : i32
    %c7_i32_30 = arith.constant 7 : i32
    %c0_i32_31 = arith.constant 0 : i32
    %28 = tpu.memref_slice %arg0[%c7_i32_30, %c0_i32_31] : memref<8x1024xf32, #tpu.memory_space<any>> -> memref<1x1024xf32, #tpu.memory_space<any>>
    %c3_i32_32 = arith.constant 3 : i32
    %c0_i32_33 = arith.constant 0 : i32
    %29 = tpu.memref_slice %arg1[%c3_i32_32, %c0_i32_33] : memref<4x1024xf32, #tpu.memory_space<any>> -> memref<1x1024xf32, #tpu.memory_space<any>>
    %30 = tpu.memref_slice %arg2[%c3_i32_29] : memref<4x!tpu.dma_semaphore, #tpu.memory_space<semaphore_mem>> -> memref<1x!tpu.dma_semaphore, #tpu.memory_space<semaphore_mem>>
    %31 = tpu.memref_squeeze %30 : memref<1x!tpu.dma_semaphore, #tpu.memory_space<semaphore_mem>> -> memref<!tpu.dma_semaphore, #tpu.memory_space<semaphore_mem>>
    tpu.wait_dma2 semaphore(%31 : memref<!tpu.dma_semaphore, #tpu.memory_space<semaphore_mem>>) src(%28 : memref<1x1024xf32, #tpu.memory_space<any>>) dst(%29 : memref<1x1024xf32, #tpu.memory_space<any>>)
    return
  }
}

</mosaic_0001>

<llo_original>
// kernel: tpu_custom_call.1
$region0: #{tpu_custom_call.1}
  #allocation0 [shape = 'u32[]', space=smem, size = 0x4, offset = 0x4, fixed_abs, tag = 'smem constant byte address 0x4 - core index']
  #allocation1 [shape = 'u32[72,128]{1,0:T(1,128)}', space=vmem, size = 0x9000, scoped, tag = 'internal scratch']
  #allocation2 [shape = 's32[4]{0}', space=sflag, size = 0x10, scoped, tag = 'scratch operand']
  #allocation3 [shape = 's32[]', space=sflag, size = 0x4, offset = 0, fixed_abs, tag = 'sflag constant byte address 0x0 - dummy sync flag']
  #allocation5 [shape = 's32[]', space=sflag, size = 0x4, offset = 0, fixed_abs, tag = 'sflag constant byte address 0x0 - dummy sync flag']
  #allocation7 [shape = 's32[]', space=sflag, size = 0x4, offset = 0, fixed_abs, tag = 'sflag constant byte address 0x0 - dummy sync flag']
  #allocation9 [shape = 's32[]', space=sflag, size = 0x4, offset = 0, fixed_abs, tag = 'sflag constant byte address 0x0 - dummy sync flag']
  %s0 = inlined_call_operand.hbm [shape: f32[8,1024], index: 0, kind: input, shape index: {}]
  %s1 = inlined_call_operand.hbm [shape: f32[4,1024], index: 1, kind: output, shape index: {}]
  %s2 = sld [smem:[#allocation0]]
  $region2: #{tpu_custom_call.1} parent=0
    _
  %s4 = ssub.s32 1, %s2
  %s5 = scalar_select 0, %s4, %s2
  $region1: #{tpu_custom_call.1} parent=0
    #allocation4 [shape = 'u32[3]{0}', space=smem, size = 0xc, scoped, tag = 'DMA stride descriptor']
    #allocation6 [shape = 'u32[3]{0}', space=smem, size = 0xc, scoped, tag = 'DMA stride descriptor']
    #allocation8 [shape = 'u32[3]{0}', space=smem, size = 0xc, scoped, tag = 'DMA stride descriptor']
    #allocation10 [shape = 'u32[3]{0}', space=smem, size = 0xc, scoped, tag = 'DMA stride descriptor']
    %s7 = sshll.u32 1, 14
    %s8 = sxor.u32 4294967295, %s7
    %s10 = sshll.u32 %s0, 4
    %s11 = int_to_ptr.hbm [resolvable:$true] %s10
    %s12 = sshll.u32 %s1, 4
    %s13 = int_to_ptr.hbm [resolvable:$true] %s12
    %17 = sst [smem:[#allocation4]] 128
    %s18 = scalar_lea.smem [#allocation4], 1
    %19 = sst [smem:[%s18]] 64
    %s20 = scalar_lea.smem [#allocation4], 2
    %21 = sst [smem:[%s20]] 1
    %23 = dma.general %s11, 128, %s13, [#allocation2], [#allocation3], [#allocation4], 0, 0
    %s24 = scalar_lea.hbm %s0, 2
    %s25 = scalar_lea.hbm %s1, 1
    %s26 = scalar_lea.sflag [#allocation2], 1
    %s28 = sshll.u32 1, 14
    %s29 = sxor.u32 4294967295, %s28
    %s31 = sshll.u32 %s24, 4
    %s32 = int_to_ptr.hbm [resolvable:$true] %s31
    %s33 = sshll.u32 %s25, 4
    %s34 = int_to_ptr.hbm [resolvable:$true] %s33
    %38 = sst [smem:[#allocation6]] 128
    %s39 = scalar_lea.smem [#allocation6], 1
    %40 = sst [smem:[%s39]] 64
    %s41 = scalar_lea.smem [#allocation6], 2
    %42 = sst [smem:[%s41]] 1
    %44 = dma.general %s32, 128, %s34, %s26, [#allocation5], [#allocation6], 0, 0
    %s45 = scalar_lea.hbm %s0, 4
    %s46 = scalar_lea.hbm %s1, 2
    %s47 = scalar_lea.sflag [#allocation2], 2
    %s49 = sshll.u32 1, 14
    %s50 = sxor.u32 4294967295, %s49
    %s52 = sshll.u32 %s45, 4
    %s53 = int_to_ptr.hbm [resolvable:$true] %s52
    %s54 = sshll.u32 %s46, 4
    %s55 = int_to_ptr.hbm [resolvable:$true] %s54
    %59 = sst [smem:[#allocation8]] 128
    %s60 = scalar_lea.smem [#allocation8], 1
    %61 = sst [smem:[%s60]] 64
    %s62 = scalar_lea.smem [#allocation8], 2
    %63 = sst [smem:[%s62]] 1
    %65 = dma.general %s53, 128, %s55, %s47, [#allocation7], [#allocation8], 0, 0
    %s66 = scalar_lea.hbm %s0, 7
    %s67 = scalar_lea.hbm %s1, 3
    %s68 = scalar_lea.sflag [#allocation2], 3
    %s70 = sshll.u32 1, 14
    %s71 = sxor.u32 4294967295, %s70
    %s73 = sshll.u32 %s66, 4
    %s74 = int_to_ptr.hbm [resolvable:$true] %s73
    %s75 = sshll.u32 %s67, 4
    %s76 = int_to_ptr.hbm [resolvable:$true] %s75
    %80 = sst [smem:[#allocation10]] 128
    %s81 = scalar_lea.smem [#allocation10], 1
    %82 = sst [smem:[%s81]] 64
    %s83 = scalar_lea.smem [#allocation10], 2
    %84 = sst [smem:[%s83]] 1
    %86 = dma.general %s74, 128, %s76, %s68, [#allocation9], [#allocation10], 0, 0
    %s87 = smul.u32 1, 8
    %s88 = sshll.u32 %s87, 4
    %89 = dma.done [#allocation2], %s88
    %s90 = sshll.u32 %s87, 4
    %91 = dma.done %s26, %s90
    %s92 = sshll.u32 %s87, 4
    %93 = dma.done %s47, %s92
    %s94 = sshll.u32 %s87, 4
    %95 = dma.done %s68, %s94
  %96 = vsyncmov [#allocation2]
  %s97 = vpop.sfrf %96
  %p98 = scmp.eq.s32.totalorder %s97, 0
  %p99 = pneg %p98
  %101 = shalt.err (%p99)
  %s102 = scalar_lea.sflag [#allocation2], 1
  %103 = vsyncmov %s102
  %s104 = vpop.sfrf %103
  %p105 = scmp.eq.s32.totalorder %s104, 0
  %p106 = pneg %p105
  %108 = shalt.err (%p106)
  %s109 = scalar_lea.sflag [#allocation2], 2
  %110 = vsyncmov %s109
  %s111 = vpop.sfrf %110
  %p112 = scmp.eq.s32.totalorder %s111, 0
  %p113 = pneg %p112
  %115 = shalt.err (%p113)
  %s116 = scalar_lea.sflag [#allocation2], 3
  %117 = vsyncmov %s116
  %s118 = vpop.sfrf %117
  %p119 = scmp.eq.s32.totalorder %s118, 0
  %p120 = pneg %p119
  %122 = shalt.err (%p120)

</llo_original>
